<compile_context>
chip_gen: v7x
topology: tpu7x:2x2x1
jax: 0.10.0
libtpu: 0.0.40
codegen_flags: <defaults>
</compile_context>

<pallas_src>
import functools
import math

import jax
import jax.numpy as jnp
from jax.experimental import pallas as pl
from jax.experimental.pallas import tpu as pltpu


def _gelu_tanh(x):
    # gelu_pytorch_tanh: 0.5 * x * (1 + tanh(sqrt(2/pi) * (x + 0.044715 * x^3)))
    c = math.sqrt(2.0 / math.pi)
    return 0.5 * x * (1.0 + jnp.tanh(c * (x + 0.044715 * x * x * x)))


def _round_up(n, m):
    return ((n + m - 1) // m) * m


# ---------------------------------------------------------------------------
# Chip-aware defaults.
# ---------------------------------------------------------------------------
def _chip_defaults():
    """Returns (tm_target, ti_cap, num_cores, vmem_limit_bytes)."""
    kind = ""
    try:
        kind = jax.devices()[0].device_kind.lower()
    except Exception:
        pass
    try:
        phys_vmem = int(pltpu.get_tpu_info().vmem_capacity_bytes)
    except Exception:
        phys_vmem = (64 if "v7" in kind else 128) * 1024 * 1024

    if "v7" in kind:
        # 2 TCs, 64 MiB VMEM, 3.2 TB/s HBM -> balance point ~320 FLOPs/byte.
        tm_target, ti_cap, cores = 512, 1024, 2
    elif "v5e" in kind or ("v5" in kind and "lite" in kind):
        # 197 TF/s / 0.82 TB/s -> already near balance at tm=256; big VMEM.
        tm_target, ti_cap, cores = 256, 2048, 1
    elif "v6" in kind:
        # 918 TF/s / ~1.35 TB/s -> needs ~680 FLOPs/weight-byte for prefill.
        tm_target, ti_cap, cores = 1024, 2048, 1
    else:
        tm_target, ti_cap, cores = 512, 2048, 1

    vmem_limit = max(32 << 20, min(phys_vmem - (8 << 20), 112 << 20))
    return tm_target, ti_cap, cores, int(vmem_limit)


def _choose_ti(H, I, tm, ti_cap, vmem_limit, act_bytes, w_bytes):
    """Largest I-tile that fits the VMEM budget (weights double-buffered +
    x/out double-buffered + f32 accumulator + f32 gate/up/h temporaries)."""
    fixed = 4 * tm * H * act_bytes + tm * H * 4        # 2x x-tile + 2x out-tile + acc
    per_ti = 6 * H * w_bytes + 12 * tm                 # 2x(3*ti*H*w) weights + 3*tm*ti*4 temps
    budget = vmem_limit - fixed - (2 << 20)            # small slack
    ti_max = budget // per_ti if budget > 0 else 128
    ti_max = max(128, min(int(ti_max), int(ti_cap)))
    if I <= ti_max:
        return int(I)                                  # single K tile
    # Prefer the largest 128-multiple <= ti_max that divides I (no padding).
    t = (ti_max // 128) * 128
    while t >= 128:
        if I % t == 0:
            return t
        t -= 128
    # Fall back: largest 128-multiple; I gets zero-padded to a multiple of ti.
    return (ti_max // 128) * 128


# ---------------------------------------------------------------------------
# One-time weight repack (do this at model-load time).
# ---------------------------------------------------------------------------
def prepare_gemma_mlp_weights(w_gate, w_up, w_down, *, ti):
    """Repack PyTorch-layout weights for the kernel.

    w_gate, w_up : (I, H)   nn.Linear (out, in) layout
    w_down       : (H, I)
    Returns:
      w_gu : (n_k, H, 2*ti)  per-I-tile [gate | up], already (K, N) for the MXU
      w_dn : (I_pad, H)      down_proj transposed; contiguous (ti, H) slabs
    """
    I, H = w_gate.shape
    assert w_up.shape == (I, H)
    assert w_down.shape == (H, I)
    ti = int(ti)
    I_pad = _round_up(I, ti)
    if I_pad != I:
        pad_rows = ((0, I_pad - I), (0, 0))
        w_gate = jnp.pad(w_gate, pad_rows)
        w_up = jnp.pad(w_up, pad_rows)
        w_down = jnp.pad(w_down, ((0, 0), (0, I_pad - I)))
    n_k = I_pad // ti
    gu = jnp.concatenate(
        [w_gate.reshape(n_k, ti, H), w_up.reshape(n_k, ti, H)], axis=1)   # (n_k, 2ti, H)
    w_gu = jnp.transpose(gu, (0, 2, 1))                                   # (n_k, H, 2ti)
    w_dn = jnp.transpose(w_down, (1, 0))                                  # (I_pad, H)
    return w_gu, w_dn


# ---------------------------------------------------------------------------
# Kernel body (shared by the standard and split-K paths).
# ---------------------------------------------------------------------------
def gemma_mlp_kernel(x_ref, wgu_ref, wd_ref, o_ref, acc_ref, *, ti):
    """One (row-tile, intermediate-tile) grid step.

    x_ref  : (tm, H)      token tile (resident across the I loop)
    wgu_ref: (H, 2*ti)    [gate | up] weight tile, (K, N) layout
    wd_ref : (ti, H)      down_proj weight tile, (K, N) layout
    o_ref  : (tm, H)      output tile (written once, at the last I tile)
    acc_ref: (tm, H) f32  accumulator scratch
    """
    k = pl.program_id(1)

    @pl.when(k == 0)
    def _():
        acc_ref[...] = jnp.zeros_like(acc_ref)

    # (tm, H) @ (H, 2*ti) -> (tm, 2*ti) with f32 MXU accumulation.
    gu = jnp.dot(x_ref[...], wgu_ref[...], preferred_element_type=jnp.float32)
    h = _gelu_tanh(gu[:, :ti]) * gu[:, ti:]          # f32, (tm, ti)

    # Partial down projection: (tm, ti) @ (ti, H) -> (tm, H).
    acc_ref[...] += jnp.dot(h.astype(wd_ref.dtype), wd_ref[...],
                            preferred_element_type=jnp.float32)

    @pl.when(k == pl.num_programs(1) - 1)
    def _():
        o_ref[...] = acc_ref[...].astype(o_ref.dtype)


# ---------------------------------------------------------------------------
# Wrappers.
# ---------------------------------------------------------------------------
def gemma_mlp_prepared(x, w_gu, w_dn, *, tm=None, split_k=None):
    """Fused GemmaMLP forward using weights from prepare_gemma_mlp_weights."""
    orig_shape = x.shape
    H = orig_shape[-1]
    x2d = x.reshape(-1, H)
    M = x2d.shape[0]

    n_k, H2, two_ti = w_gu.shape
    assert H2 == H, (w_gu.shape, H)
    ti = two_ti // 2
    I_pad = n_k * ti
    assert w_dn.shape == (I_pad, H), (w_dn.shape, I_pad, H)

    tm_target, _, cores, vmem_limit = _chip_defaults()

    # ---- token-tile size: roofline target, capped by M, padded if ragged --
    if tm is None:
        tm = tm_target
    tm = max(8, _round_up(min(tm, _round_up(M, 8)), 8))
    if cores > 1 and _round_up(M, 8) >= 16:
        # keep n_m >= 2 so the "parallel" M axis actually shards across TCs
        tm = min(tm, _round_up(M, 16) // 2)
    M_pad = _round_up(M, tm)
    if M_pad != M:
        x2d = jnp.pad(x2d, ((0, M_pad - M), (0, 0)))
    n_m = M_pad // tm

    # ---- split-K decode path selection ------------------------------------
    if split_k is None:
        split_k = cores if (cores > 1 and n_m == 1 and n_k % cores == 0
                            and n_k >= 2 * cores) else 1
    split_k = int(split_k)
    if n_m != 1 or n_k % split_k != 0:
        split_k = 1

    act_bytes = jnp.dtype(x2d.dtype).itemsize
    w_bytes = jnp.dtype(w_gu.dtype).itemsize
    cost = pl.CostEstimate(
        flops=int(6 * M_pad * H * I_pad),
        transcendentals=int(M_pad * I_pad),
        bytes_accessed=int(2 * M_pad * H * act_bytes
                           + max(n_m, 1) * 3 * I_pad * H * w_bytes),
    )
    kernel = functools.partial(gemma_mlp_kernel, ti=ti)
    cparams = pltpu.CompilerParams(
        dimension_semantics=("parallel", "arbitrary"),
        vmem_limit_bytes=int(vmem_limit),
    )

    if split_k == 1:
        out2d = pl.pallas_call(
            kernel,
            out_shape=jax.ShapeDtypeStruct((M_pad, H), x.dtype),
            grid_spec=pltpu.PrefetchScalarGridSpec(
                num_scalar_prefetch=0,
                grid=(n_m, n_k),
                in_specs=[
                    pl.BlockSpec((tm, H), lambda i, k: (i, 0)),          # x (resident over k)
                    pl.BlockSpec((None, H, 2 * ti), lambda i, k: (k, 0, 0)),  # [gate|up] tile
                    pl.BlockSpec((ti, H), lambda i, k: (k, 0)),          # down tile
                ],
                out_specs=pl.BlockSpec((tm, H), lambda i, k: (i, 0)),
                scratch_shapes=[pltpu.VMEM((tm, H), jnp.float32)],
            ),
            compiler_params=cparams,
            cost_estimate=cost,
        )(x2d, w_gu, w_dn)
    else:
        # Split-K: each split streams n_k/split_k weight tiles into its own
        # f32 partial; partials are summed (tiny M, negligible extra HBM).
        kk = n_k // split_k
        partials = pl.pallas_call(
            kernel,
            out_shape=jax.ShapeDtypeStruct((split_k, M_pad, H), jnp.float32),
            grid_spec=pltpu.PrefetchScalarGridSpec(
                num_scalar_prefetch=0,
                grid=(split_k, kk),
                in_specs=[
                    pl.BlockSpec((tm, H), lambda s, k: (0, 0)),
                    pl.BlockSpec((None, H, 2 * ti),
                                 lambda s, k, _kk=kk: (s * _kk + k, 0, 0)),
                    pl.BlockSpec((ti, H),
                                 lambda s, k, _kk=kk: (s * _kk + k, 0)),
                ],
                out_specs=pl.BlockSpec((None, tm, H), lambda s, k: (s, 0, 0)),
                scratch_shapes=[pltpu.VMEM((tm, H), jnp.float32)],
            ),
            compiler_params=cparams,
            cost_estimate=cost,
        )(x2d, w_gu, w_dn)
        out2d = jnp.sum(partials, axis=0).astype(x.dtype)

    if M_pad != M:
        out2d = out2d[:M]
    return out2d.reshape(orig_shape)


def gemma_mlp(x, w_gate, w_up, w_down, *, tm=None, ti=None, split_k=None):
    """Convenience wrapper taking raw PyTorch-layout weights.

    x      : [..., hidden]
    w_gate : (intermediate, hidden)   -- nn.Linear (out, in) layout
    w_up   : (intermediate, hidden)
    w_down : (hidden, intermediate)
    """
    H = x.shape[-1]
    I = w_gate.shape[0]
    tm_target, ti_cap, _, vmem_limit = _chip_defaults()
    if ti is None:
        budget_tm = tm if tm is not None else tm_target
        budget_tm = max(8, _round_up(min(int(budget_tm), 4096), 8))
        ti = _choose_ti(H, I,
                        budget_tm, ti_cap, vmem_limit,
                        jnp.dtype(x.dtype).itemsize,
                        jnp.dtype(w_gate.dtype).itemsize)
    # TODO(synk): in a real model, call prepare_gemma_mlp_weights once at
    # model-load time and reuse w_gu/w_dn across calls instead of per-call.
    w_gu, w_dn = prepare_gemma_mlp_weights(w_gate, w_up, w_down, ti=ti)
    return gemma_mlp_prepared(x, w_gu, w_dn, tm=tm, split_k=split_k)


def gemma_mlp_reference(x, w_gate, w_up, w_down):
    gate = jnp.einsum("...h,ih->...i", x, w_gate)
    up = jnp.einsum("...h,ih->...i", x, w_up)
    h = _gelu_tanh(gate) * up
    return jnp.einsum("...i,hi->...h", h, w_down)


if __name__ == "__main__":
    key = jax.random.PRNGKey(0)

    # ---- test 1: toy module shapes, f32, single grid step ----------------
    batch, seq, hidden, inter = 2, 8, 32, 64
    kx, kg, ku, kd = jax.random.split(key, 4)
    x = jax.random.normal(kx, (batch, seq, hidden), dtype=jnp.float32)
    w_gate = jax.random.normal(kg, (inter, hidden), dtype=jnp.float32) * 0.05
    w_up = jax.random.normal(ku, (inter, hidden), dtype=jnp.float32) * 0.05
    w_down = jax.random.normal(kd, (hidden, inter), dtype=jnp.float32) * 0.05

    out = jax.block_until_ready(gemma_mlp(x, w_gate, w_up, w_down))
    ref = gemma_mlp_reference(x, w_gate, w_up, w_down)
    assert out.shape == x.shape
    assert jnp.allclose(out, ref, atol=1e-5, rtol=1e-5), "f32 mismatch vs reference"

    # ---- test 2: I-tiling + I zero-padding + ragged-M padding ------------
    b2, s2, h2, i2 = 2, 9, 128, 320   # M=18 (ragged), I=320 -> padded to 384, 3 I-tiles
    k2x, k2g, k2u, k2d = jax.random.split(jax.random.PRNGKey(1), 4)
    x2 = jax.random.normal(k2x, (b2, s2, h2), dtype=jnp.float32)
    wg2 = jax.random.normal(k2g, (i2, h2), dtype=jnp.float32) * 0.05
    wu2 = jax.random.normal(k2u, (i2, h2), dtype=jnp.float32) * 0.05
    wd2 = jax.random.normal(k2d, (h2, i2), dtype=jnp.float32) * 0.05

    out2 = jax.block_until_ready(gemma_mlp(x2, wg2, wu2, wd2, tm=8, ti=128))
    ref2 = gemma_mlp_reference(x2, wg2, wu2, wd2)
    assert out2.shape == x2.shape
    assert jnp.allclose(out2, ref2, atol=1e-4, rtol=1e-4), "tiled mismatch vs reference"

    # ---- test 3: bf16 activations/weights (production dtype) -------------
    xb = x.astype(jnp.bfloat16)
    wgb, wub, wdb = (w.astype(jnp.bfloat16) for w in (w_gate, w_up, w_down))
    outb = jax.block_until_ready(gemma_mlp(xb, wgb, wub, wdb))
    refb = gemma_mlp_reference(xb.astype(jnp.float32), wgb.astype(jnp.float32),
                               wub.astype(jnp.float32), wdb.astype(jnp.float32))
    assert outb.dtype == jnp.bfloat16
    assert jnp.allclose(outb.astype(jnp.float32), refb, atol=2e-2, rtol=1e-1), \
        "bf16 mismatch vs reference"

    # ---- test 4: split-K decode path (forced; exercises partial-sum) -----
    b4, s4, h4, i4 = 1, 4, 128, 512   # M=4 (decode-like), 4 I-tiles, split 2
    k4x, k4g, k4u, k4d = jax.random.split(jax.random.PRNGKey(2), 4)
    x4 = jax.random.normal(k4x, (b4, s4, h4), dtype=jnp.float32)
    wg4 = jax.random.normal(k4g, (i4, h4), dtype=jnp.float32) * 0.05
    wu4 = jax.random.normal(k4u, (i4, h4), dtype=jnp.float32) * 0.05
    wd4 = jax.random.normal(k4d, (h4, i4), dtype=jnp.float32) * 0.05

    out4 = jax.block_until_ready(gemma_mlp(x4, wg4, wu4, wd4, ti=128, split_k=2))
    ref4 = gemma_mlp_reference(x4, wg4, wu4, wd4)
    assert out4.shape == x4.shape
    assert jnp.allclose(out4, ref4, atol=1e-4, rtol=1e-4), "split-K mismatch vs reference"

    print("KERNEL_OK")
</pallas_src>

<mosaic_0001>
module attributes {stable_mosaic.version = 11 : i64} {
  func.func @gemma_mlp_kernel(%arg0: i32, %arg1: i32, %arg2: memref<16x32xf32, #tpu.memory_space<vmem>>, %arg3: memref<1x32x128xf32, #tpu.memory_space<vmem>>, %arg4: memref<64x32xf32, #tpu.memory_space<vmem>>, %arg5: memref<16x32xf32, #tpu.memory_space<vmem>>, %arg6: memref<16x32xf32, #tpu.memory_space<vmem>>) attributes {dimension_semantics = [#tpu.dimension_semantics<parallel>, #tpu.dimension_semantics<arbitrary>], iteration_bounds = array<i64: 1, 1>, scalar_prefetch = 0 : i64, scratch_operands = 1 : i64, tpu.core_type = #tpu.core_type<tc>, window_params = [{transform_indices = @transform_0, window_bounds = array<i64: 16, 32>}, {transform_indices = @transform_1, window_bounds = array<i64: 1, 32, 128>}, {transform_indices = @transform_2, window_bounds = array<i64: 64, 32>}, {transform_indices = @transform_3, window_bounds = array<i64: 16, 32>}]} {
    %c0_i32 = arith.constant 0 : i32
    %0 = arith.cmpi eq, %arg1, %c0_i32 : i32
    %1 = arith.extui %0 : i1 to i32
    %c0_i32_0 = arith.constant 0 : i32
    %2 = arith.cmpi ne, %1, %c0_i32_0 : i32
    scf.if %2 {
      %cst_18 = arith.constant 0.000000e+00 : f32
      %31 = vector.broadcast %cst_18 : f32 to vector<16x32xf32>
      %c0_19 = arith.constant 0 : index
      %c0_20 = arith.constant 0 : index
      %32 = vector.load %arg6[%c0_19, %c0_20] : memref<16x32xf32, #tpu.memory_space<vmem>>, vector<16x32xf32>
      tpu.vector_store %arg6[%c0_19, %c0_20], %31 {strides = array<i32>} : memref<16x32xf32, #tpu.memory_space<vmem>>, vector<16x32xf32>,
    } else {
    }
    %c0 = arith.constant 0 : index
    %c0_1 = arith.constant 0 : index
    %3 = vector.load %arg2[%c0, %c0_1] : memref<16x32xf32, #tpu.memory_space<vmem>>, vector<16x32xf32>
    %c0_2 = arith.constant 0 : index
    %c0_3 = arith.constant 0 : index
    %c0_4 = arith.constant 0 : index
    %4 = vector.load %arg3[%c0_2, %c0_3, %c0_4] : memref<1x32x128xf32, #tpu.memory_space<vmem>>, vector<1x32x128xf32>
    %5 = vector.shape_cast %4 : vector<1x32x128xf32> to vector<32x128xf32>
    %cst = arith.constant dense<0.000000e+00> : vector<16x128xf32>
    %6 = tpu.matmul %3, %5, %cst {dimension_numbers = #tpu.dot_dimension_numbers<[1], [0], [0], [1], [0, 0, 1, 1], [], []>} : vector<16x32xf32>, vector<32x128xf32>, vector<16x128xf32> -> vector<16x128xf32>
    %7 = vector.extract_strided_slice %6 {offsets = [0, 0], sizes = [16, 64], strides = [1, 1]} : vector<16x128xf32> to vector<16x64xf32>
    %cst_5 = arith.constant 5.000000e-01 : f32
    %8 = vector.broadcast %cst_5 : f32 to vector<16x64xf32>
    %9 = arith.mulf %8, %7 : vector<16x64xf32>
    %cst_6 = arith.constant 4.471500e-02 : f32
    %10 = vector.broadcast %cst_6 : f32 to vector<16x64xf32>
    %11 = arith.mulf %10, %7 : vector<16x64xf32>
    %12 = arith.mulf %11, %7 : vector<16x64xf32>
    %13 = arith.mulf %12, %7 : vector<16x64xf32>
    %14 = arith.addf %7, %13 : vector<16x64xf32>
    %cst_7 = arith.constant 0.797884583 : f32
    %15 = vector.broadcast %cst_7 : f32 to vector<16x64xf32>
    %16 = arith.mulf %15, %14 : vector<16x64xf32>
    %17 = math.tanh %16 : vector<16x64xf32>
    %cst_8 = arith.constant 1.000000e+00 : f32
    %18 = vector.broadcast %cst_8 : f32 to vector<16x64xf32>
    %19 = arith.addf %18, %17 : vector<16x64xf32>
    %20 = arith.mulf %9, %19 : vector<16x64xf32>
    %21 = vector.extract_strided_slice %6 {offsets = [0, 64], sizes = [16, 64], strides = [1, 1]} : vector<16x128xf32> to vector<16x64xf32>
    %22 = arith.mulf %20, %21 : vector<16x64xf32>
    %c0_9 = arith.constant 0 : index
    %c0_10 = arith.constant 0 : index
    %23 = vector.load %arg6[%c0_9, %c0_10] : memref<16x32xf32, #tpu.memory_space<vmem>>, vector<16x32xf32>
    %c0_11 = arith.constant 0 : index
    %c0_12 = arith.constant 0 : index
    %24 = vector.load %arg4[%c0_11, %c0_12] : memref<64x32xf32, #tpu.memory_space<vmem>>, vector<64x32xf32>
    %cst_13 = arith.constant dense<0.000000e+00> : vector<16x32xf32>
    %25 = tpu.matmul %22, %24, %cst_13 {dimension_numbers = #tpu.dot_dimension_numbers<[1], [0], [0], [1], [0, 0, 1, 1], [], []>} : vector<16x64xf32>, vector<64x32xf32>, vector<16x32xf32> -> vector<16x32xf32>
    %26 = arith.addf %23, %25 : vector<16x32xf32>
    %c0_14 = arith.constant 0 : index
    %c0_15 = arith.constant 0 : index
    %27 = vector.load %arg6[%c0_14, %c0_15] : memref<16x32xf32, #tpu.memory_space<vmem>>, vector<16x32xf32>
    tpu.vector_store %arg6[%c0_14, %c0_15], %26 {strides = array<i32>} : memref<16x32xf32, #tpu.memory_space<vmem>>, vector<16x32xf32>,
    %c0_i32_16 = arith.constant 0 : i32
    %28 = arith.cmpi eq, %arg1, %c0_i32_16 : i32
    %29 = arith.extui %28 : i1 to i32
    %c0_i32_17 = arith.constant 0 : i32
    %30 = arith.cmpi ne, %29, %c0_i32_17 : i32
    scf.if %30 {
      %c0_18 = arith.constant 0 : index
      %c0_19 = arith.constant 0 : index
      %31 = vector.load %arg6[%c0_18, %c0_19] : memref<16x32xf32, #tpu.memory_space<vmem>>, vector<16x32xf32>
      %c0_20 = arith.constant 0 : index
      %c0_21 = arith.constant 0 : index
      %32 = vector.load %arg5[%c0_20, %c0_21] : memref<16x32xf32, #tpu.memory_space<vmem>>, vector<16x32xf32>
      tpu.vector_store %arg5[%c0_20, %c0_21], %31 {strides = array<i32>} : memref<16x32xf32, #tpu.memory_space<vmem>>, vector<16x32xf32>,
    } else {
    }
    return
  }
  func.func @transform_0(%arg0: i32, %arg1: i32) -> (i32, i32) {
    %c0_i32 = arith.constant 0 : i32
    %c0_i32_0 = arith.constant 0 : i32
    return %arg0, %c0_i32 : i32, i32
  }
  func.func @transform_1(%arg0: i32, %arg1: i32) -> (i32, i32, i32) {
    %c0_i32 = arith.constant 0 : i32
    %c0_i32_0 = arith.constant 0 : i32
    %c0_i32_1 = arith.constant 0 : i32
    return %arg1, %c0_i32, %c0_i32_0 : i32, i32, i32
  }
  func.func @transform_2(%arg0: i32, %arg1: i32) -> (i32, i32) {
    %c0_i32 = arith.constant 0 : i32
    %c0_i32_0 = arith.constant 0 : i32
    return %arg1, %c0_i32 : i32, i32
  }
  func.func @transform_3(%arg0: i32, %arg1: i32) -> (i32, i32) {
    %c0_i32 = arith.constant 0 : i32
    %c0_i32_0 = arith.constant 0 : i32
    return %arg0, %c0_i32 : i32, i32
  }
}

</mosaic_0001>

<llo_original>
// kernel: tpu_custom_call.1
$region0: #{tpu_custom_call.1}
  #allocation0 [shape = 'u32[]', space=smem, size = 0x4, offset = 0x4, fixed_abs, tag = 'smem constant byte address 0x4 - core index']
  #allocation1 [shape = 'u32[144,128]{1,0:T(1,128)}', space=vmem, size = 0x12000, scoped, tag = 'internal scratch']
  #allocation2 [shape = 'f32[16,32]{1,0:T(8,128)}', space=vmem, size = 0x2000, scoped, tag = 'scratch operand']
  %s0 = inlined_call_operand.hbm [shape: f32[16,32], index: 0, kind: input, shape index: {}]
  %s1 = inlined_call_operand.hbm [shape: f32[1,32,128], index: 1, kind: input, shape index: {}]
  %s2 = inlined_call_operand.hbm [shape: f32[64,32], index: 2, kind: input, shape index: {}]
  %s3 = inlined_call_operand.hbm [shape: f32[16,32], index: 3, kind: output, shape index: {}]
  %s4 = sld [smem:[#allocation0]]
  $region42: #{tpu_custom_call.1} parent=0
    _
  %s6 = ssub.s32 1, %s4
  %s7 = scalar_select 0, %s6, %s4
  $region1: #{tpu_custom_call.1} parent=0
    #allocation3 [shape = 'u8[8192]{0}', space=vmem, size = 0x2000, scoped, tag = 'input window, operand 0, single buffered']
    #allocation4 [shape = 's32[1]{0}', space=sflag, size = 0x4, scoped, tag = 'scoped memory for tpu_custom_call.1']
    #allocation5 [shape = 's32[1]{0}', space=sflag, size = 0x4, scoped, tag = 'scoped memory for tpu_custom_call.1']
    #allocation6 [shape = 'u8[16384]{0}', space=vmem, size = 0x4000, scoped, tag = 'input window, operand 1, single buffered']
    #allocation7 [shape = 's32[1]{0}', space=sflag, size = 0x4, scoped, tag = 'scoped memory for tpu_custom_call.1']
    #allocation8 [shape = 'u8[32768]{0}', space=vmem, size = 0x8000, scoped, tag = 'input window, operand 2, single buffered']
    #allocation9 [shape = 'u8[8192]{0}', space=vmem, size = 0x2000, scoped, tag = 'output window, operand 0, single buffered']
    %8 = vsyncpa [#allocation4], 0
    %9 = vsyncpa [#allocation7], 0
    %10 = vsyncpa [#allocation5], 0
    // Predicated region
    $region2: #{tpu_custom_call.1} parent=1 // pred_check
      _
    $region3: #{tpu_custom_call.1} parent=1 // pred_check_branch
      %12 = sbr.rel (0) target = $region5
    $region4: #{tpu_custom_call.1} parent=1 // pred_region
      %s14 = ssub.s32 256, 256
      %15 = vsyncadd [#allocation4], %s14
      %s16 = sshll.u32 [#allocation3], 4
      %s17 = int_to_ptr.vmem [resolvable:$true] %s16
      %22 = dma.hbm_to_vmem [thread:$0]  %s0, 256, %s17, [#allocation4], 128, 128, 8
    $region5: #{tpu_custom_call.1} parent=1 // pred_fallthru
      _
    // Predicated region
    $region6: #{tpu_custom_call.1} parent=1 // pred_check
      _
    $region7: #{tpu_custom_call.1} parent=1 // pred_check_branch
      %24 = sbr.rel (0) target = $region9
    $region8: #{tpu_custom_call.1} parent=1 // pred_region
      %s26 = ssub.s32 512, 512
      %27 = vsyncadd [#allocation7], %s26
      %s28 = sshll.u32 [#allocation6], 4
      %s29 = int_to_ptr.vmem [resolvable:$true] %s28
      %34 = dma.hbm_to_vmem [thread:$0]  %s1, 512, %s29, [#allocation7], 128, 128, 8
    $region9: #{tpu_custom_call.1} parent=1 // pred_fallthru
      _
    // Predicated region
    $region10: #{tpu_custom_call.1} parent=1 // pred_check
      _
    $region11: #{tpu_custom_call.1} parent=1 // pred_check_branch
      %36 = sbr.rel (0) target = $region13
    $region12: #{tpu_custom_call.1} parent=1 // pred_region
      %s38 = ssub.s32 1024, 1024
      %39 = vsyncadd [#allocation7], %s38
      %s40 = sshll.u32 [#allocation8], 4
      %s41 = int_to_ptr.vmem [resolvable:$true] %s40
      %46 = dma.hbm_to_vmem [thread:$0]  %s2, 1024, %s41, [#allocation7], 128, 128, 8
    $region13: #{tpu_custom_call.1} parent=1 // pred_fallthru
      _
    // Predicated region
    $region14: #{tpu_custom_call.1} parent=1 // pred_check
      _
    $region15: #{tpu_custom_call.1} parent=1 // pred_check_branch
      %48 = sbr.rel (0) target = $region17
    $region16: #{tpu_custom_call.1} parent=1 // pred_region
      %49 = dma.done [#allocation4], 256
    $region17: #{tpu_custom_call.1} parent=1 // pred_fallthru
      _
    // Predicated region
    $region18: #{tpu_custom_call.1} parent=1 // pred_check
      _
    $region19: #{tpu_custom_call.1} parent=1 // pred_check_branch
      %51 = sbr.rel (0) target = $region21
    $region20: #{tpu_custom_call.1} parent=1 // pred_region
      %52 = dma.done [#allocation7], 512
    $region21: #{tpu_custom_call.1} parent=1 // pred_fallthru
      _
    // Predicated region
    $region22: #{tpu_custom_call.1} parent=1 // pred_check
      _
    $region23: #{tpu_custom_call.1} parent=1 // pred_check_branch
      %54 = sbr.rel (0) target = $region25
    $region24: #{tpu_custom_call.1} parent=1 // pred_region
      %55 = dma.done [#allocation7], 1024
    $region25: #{tpu_custom_call.1} parent=1 // pred_fallthru
      _
    %p56 = scmp.eq.s32.totalorder 0, 0
    // Predicated region
    $region26: #{tpu_custom_call.1} parent=1 // pred_check
      %p57 = pneg %p56
    $region27: #{tpu_custom_call.1} parent=1 // pred_check_branch
      %59 = sbr.rel (%p57) target = $region29
    $region28: #{tpu_custom_call.1} parent=1 // pred_region
      %vm60 = vcmask 261120
      %61 = vst.msk [vmem:[#allocation2] sm:$0xff] %vm60, 0.0
      %62 = vst.msk [vmem:[#allocation2 + $0x8] sm:$0xff] %vm60, 0.0
    $region29: #{tpu_custom_call.1} parent=1 // pred_fallthru
      _
    %v63 = vld [vmem:[#allocation3] sm:$0xff]
    %v64 = vld [vmem:[#allocation3 + $0x8] sm:$0xff]
    %v65 = vld [vmem:[#allocation6] sm:$0xff]
    %v66 = vld [vmem:[#allocation6 + $0x8] sm:$0xff]
    %v67 = vld [vmem:[#allocation6 + $0x10] sm:$0xff]
    %v68 = vld [vmem:[#allocation6 + $0x18] sm:$0xff]
    %vm69 = vcmask 261120
    %v71 = vsel %vm69, %v63, 0
    %v74 = vsel %vm69, %v64, 0
    %76 = vmatprep.subr.mxu0 0.0
    %77 = vmatpush1.msra.mxu0 %v65
    %78 = vmatprep.subr.mxu0 0.0
    %79 = vmatpush1.msra.mxu0 %v66
    %80 = vmatprep.subr.mxu0 0.0
    %81 = vmatpush1.msra.mxu0 %v67
    %82 = vmatprep.subr.mxu0 0.0
    %83 = vmatpush1.msra.mxu0 %v68
    %84 = vmatprep.subr.mxu0 0.0
    %85 = vmatpush1.msra.mxu0 0.0
    %86 = vmatprep.subr.mxu0 0.0
    %87 = vmatpush1.msra.mxu0 0.0
    %88 = vmatprep.subr.mxu0 0.0
    %89 = vmatpush1.msra.mxu0 0.0
    %90 = vmatprep.subr.mxu0 0.0
    %91 = vmatpush1.msra.mxu0 0.0
    %92 = vmatprep.subr.mxu0 0.0
    %93 = vmatpush1.msra.mxu0 0.0
    %94 = vmatprep.subr.mxu0 0.0
    %95 = vmatpush1.msra.mxu0 0.0
    %96 = vmatprep.subr.mxu0 0.0
    %97 = vmatpush1.msra.mxu0 0.0
    %98 = vmatprep.subr.mxu0 0.0
    %99 = vmatpush1.msra.mxu0 0.0
    %100 = vmatprep.subr.mxu0 0.0
    %101 = vmatpush1.msra.mxu0 0.0
    %102 = vmatprep.subr.mxu0 0.0
    %103 = vmatpush1.msra.mxu0 0.0
    %104 = vmatprep.subr.mxu0 0.0
    %105 = vmatpush1.msra.mxu0 0.0
    %106 = vmatprep.subr.mxu0 0.0
    %107 = vmatpush1.msra.mxu0 0.0
    %108 = vmatprep.subr.mxu0 0.0
    %109 = vmatpush1.msra.mxu0 0.0
    %110 = vmatprep.subr.mxu0 0.0
    %111 = vmatpush1.msra.mxu0 0.0
    %112 = vmatprep.subr.mxu0 0.0
    %113 = vmatpush1.msra.mxu0 0.0
    %114 = vmatprep.subr.mxu0 0.0
    %115 = vmatpush1.msra.mxu0 0.0
    %116 = vmatprep.subr.mxu0 0.0
    %117 = vmatpush1.msra.mxu0 0.0
    %118 = vmatprep.subr.mxu0 0.0
    %119 = vmatpush1.msra.mxu0 0.0
    %120 = vmatprep.subr.mxu0 0.0
    %121 = vmatpush1.msra.mxu0 0.0
    %122 = vmatprep.subr.mxu0 0.0
    %123 = vmatpush1.msra.mxu0 0.0
    %124 = vmatprep.subr.mxu0 0.0
    %125 = vmatpush1.msra.mxu0 0.0
    %126 = vmatprep.subr.mxu0 0.0
    %127 = vmatpush1.msra.mxu0 0.0
    %128 = vmatprep.subr.mxu0 0.0
    %129 = vmatpush1.msra.mxu0 0.0
    %130 = vmatprep.subr.mxu0 0.0
    %131 = vmatpush1.msra.mxu0 0.0
    %132 = vmatprep.subr.mxu0 0.0
    %133 = vmatpush1.msra.mxu0 0.0
    %134 = vmatprep.subr.mxu0 0.0
    %135 = vmatpush1.msra.mxu0 0.0
    %136 = vmatprep.subr.mxu0 0.0
    %137 = vmatpush1.msra.mxu0 0.0
    %138 = vmatprep.subr.mxu0 0.0
    %139 = vmatpush1.msra.mxu0 0.0
    %140 = vmatprep.mubr.f32.mxu0 0.0
    %141 = vmatmul.mubr.f32.gmra.mrb[0].mxu0 %v71
    %v142 = vpop.f32.mrb[0].mxu0
    %v143 = vadd.f32 0.0, %v142
    %v144 = vpop.f32.mrb[0].mxu0
    %145 = vmatprep.mubr.f32.mxu0 0.0
    %146 = vmatmul.mubr.f32.gmra.mrb[0].mxu0 %v74
    %v147 = vpop.f32.mrb[0].mxu0
    %v148 = vadd.f32 0.0, %v147
    %v149 = vpop.f32.mrb[0].mxu0
    %150 = vdwg.mxu0
    %v151 = vmul.f32 %v143, 0.5
    %v152 = vmul.f32 %v148, 0.5
    %v153 = vmul.f32 %v143, 0.044715
    %v154 = vmul.f32 %v148, 0.044715
    %v155 = vmul.f32 %v153, %v143
    %v156 = vmul.f32 %v154, %v148
    %v157 = vmul.f32 %v155, %v143
    %v158 = vmul.f32 %v156, %v148
    %v159 = vadd.f32 %v143, %v157
    %v160 = vadd.f32 %v148, %v158
    %v161 = vmul.f32 %v159, 0.7978846
    %v162 = vmul.f32 %v160, 0.7978846
    %v163 = vtanh.pop %v161
    %v164 = vtanh.pop %v162
    %v165 = vadd.f32 %v163, 1.0
    %v166 = vadd.f32 %v164, 1.0
    %v167 = vmul.f32 %v151, %v165
    %v168 = vmul.f32 %v152, %v166
    %171 = vrot.lane.b32.xlu0 %v143, 64
    %v172 = vpop.permute.xlu0 %171
    %173 = vrot.lane.b32.xlu0 %v148, 64
    %v174 = vpop.permute.xlu0 %173
    %v177 = vmul.f32 %v167, %v172
    %v178 = vmul.f32 %v168, %v174
    %v179 = vld [vmem:[#allocation2] sm:$0xff]
    %v180 = vld [vmem:[#allocation2 + $0x8] sm:$0xff]
    %v181 = vld [vmem:[#allocation8] sm:$0xff]
    %v182 = vld [vmem:[#allocation8 + $0x8] sm:$0xff]
    %v183 = vld [vmem:[#allocation8 + $0x10] sm:$0xff]
    %v184 = vld [vmem:[#allocation8 + $0x18] sm:$0xff]
    %v185 = vld [vmem:[#allocation8 + $0x20] sm:$0xff]
    %v186 = vld [vmem:[#allocation8 + $0x28] sm:$0xff]
    %v187 = vld [vmem:[#allocation8 + $0x30] sm:$0xff]
    %v188 = vld [vmem:[#allocation8 + $0x38] sm:$0xff]
    %vm189 = vcmask 523264
    %v191 = vsel %vm189, %v177, 0
    %v194 = vsel %vm189, %v178, 0
    %196 = vmatprep.subr.mxu0 0.0
    %197 = vmatpush1.msra.mxu0 %v181
    %198 = vmatprep.subr.mxu0 0.0
    %199 = vmatpush1.msra.mxu0 %v182
    %200 = vmatprep.subr.mxu0 0.0
    %201 = vmatpush1.msra.mxu0 %v183
    %202 = vmatprep.subr.mxu0 0.0
    %203 = vmatpush1.msra.mxu0 %v184
    %204 = vmatprep.subr.mxu0 0.0
    %205 = vmatpush1.msra.mxu0 %v185
    %206 = vmatprep.subr.mxu0 0.0
    %207 = vmatpush1.msra.mxu0 %v186
    %208 = vmatprep.subr.mxu0 0.0
    %209 = vmatpush1.msra.mxu0 %v187
    %210 = vmatprep.subr.mxu0 0.0
    %211 = vmatpush1.msra.mxu0 %v188
    %212 = vmatprep.subr.mxu0 0.0
    %213 = vmatpush1.msra.mxu0 0.0
    %214 = vmatprep.subr.mxu0 0.0
    %215 = vmatpush1.msra.mxu0 0.0
    %216 = vmatprep.subr.mxu0 0.0
    %217 = vmatpush1.msra.mxu0 0.0
    %218 = vmatprep.subr.mxu0 0.0
    %219 = vmatpush1.msra.mxu0 0.0
    %220 = vmatprep.subr.mxu0 0.0
    %221 = vmatpush1.msra.mxu0 0.0
    %222 = vmatprep.subr.mxu0 0.0
    %223 = vmatpush1.msra.mxu0 0.0
    %224 = vmatprep.subr.mxu0 0.0
    %225 = vmatpush1.msra.mxu0 0.0
    %226 = vmatprep.subr.mxu0 0.0
    %227 = vmatpush1.msra.mxu0 0.0
    %228 = vmatprep.subr.mxu0 0.0
    %229 = vmatpush1.msra.mxu0 0.0
    %230 = vmatprep.subr.mxu0 0.0
    %231 = vmatpush1.msra.mxu0 0.0
    %232 = vmatprep.subr.mxu0 0.0
    %233 = vmatpush1.msra.mxu0 0.0
    %234 = vmatprep.subr.mxu0 0.0
    %235 = vmatpush1.msra.mxu0 0.0
    %236 = vmatprep.subr.mxu0 0.0
    %237 = vmatpush1.msra.mxu0 0.0
    %238 = vmatprep.subr.mxu0 0.0
    %239 = vmatpush1.msra.mxu0 0.0
    %240 = vmatprep.subr.mxu0 0.0
    %241 = vmatpush1.msra.mxu0 0.0
    %242 = vmatprep.subr.mxu0 0.0
    %243 = vmatpush1.msra.mxu0 0.0
    %244 = vmatprep.subr.mxu0 0.0
    %245 = vmatpush1.msra.mxu0 0.0
    %246 = vmatprep.subr.mxu0 0.0
    %247 = vmatpush1.msra.mxu0 0.0
    %248 = vmatprep.subr.mxu0 0.0
    %249 = vmatpush1.msra.mxu0 0.0
    %250 = vmatprep.subr.mxu0 0.0
    %251 = vmatpush1.msra.mxu0 0.0
    %252 = vmatprep.subr.mxu0 0.0
    %253 = vmatpush1.msra.mxu0 0.0
    %254 = vmatprep.subr.mxu0 0.0
    %255 = vmatpush1.msra.mxu0 0.0
    %256 = vmatprep.subr.mxu0 0.0
    %257 = vmatpush1.msra.mxu0 0.0
    %258 = vmatprep.subr.mxu0 0.0
    %259 = vmatpush1.msra.mxu0 0.0
    %260 = vmatprep.mubr.f32.mxu0 0.0
    %261 = vmatmul.mubr.f32.gmra.mrb[0].mxu0 %v191
    %v262 = vpop.f32.mrb[0].mxu0
    %v263 = vadd.f32 0.0, %v262
    %v264 = vpop.f32.mrb[0].mxu0
    %265 = vmatprep.mubr.f32.mxu0 0.0
    %266 = vmatmul.mubr.f32.gmra.mrb[0].mxu0 %v194
    %v267 = vpop.f32.mrb[0].mxu0
    %v268 = vadd.f32 0.0, %v267
    %v269 = vpop.f32.mrb[0].mxu0
    %270 = vdwg.mxu0
    %v271 = vadd.f32 %v179, %v263
    %v272 = vadd.f32 %v180, %v268
    %273 = vst.msk [vmem:[#allocation2] sm:$0xff] %vm69, %v271
    %274 = vst.msk [vmem:[#allocation2 + $0x8] sm:$0xff] %vm69, %v272
    // Predicated region
    $region30: #{tpu_custom_call.1} parent=1 // pred_check
      %p275 = pneg %p56
    $region31: #{tpu_custom_call.1} parent=1 // pred_check_branch
      %277 = sbr.rel (%p275) target = $region33
    $region32: #{tpu_custom_call.1} parent=1 // pred_region
      %v278 = vld [vmem:[#allocation2] sm:$0xff]
      %v279 = vld [vmem:[#allocation2 + $0x8] sm:$0xff]
      %280 = vst.msk [vmem:[#allocation9] sm:$0xff] %vm69, %v278
      %281 = vst.msk [vmem:[#allocation9 + $0x8] sm:$0xff] %vm69, %v279
    $region33: #{tpu_custom_call.1} parent=1 // pred_fallthru
      _
    // Predicated region
    $region34: #{tpu_custom_call.1} parent=1 // pred_check
      _
    $region35: #{tpu_custom_call.1} parent=1 // pred_check_branch
      %283 = sbr.rel (0) target = $region37
    $region36: #{tpu_custom_call.1} parent=1 // pred_region
      %s285 = ssub.s32 256, 256
      %286 = vsyncadd [#allocation5], %s285
      %s287 = sshll.u32 [#allocation9], 4
      %s288 = int_to_ptr.vmem [resolvable:$true] %s287
      %293 = dma.vmem_to_hbm [thread:$0]  %s288, 256, %s3, [#allocation5], 128, 128, 8
    $region37: #{tpu_custom_call.1} parent=1 // pred_fallthru
      _
    // Predicated region
    $region38: #{tpu_custom_call.1} parent=1 // pred_check
      _
    $region39: #{tpu_custom_call.1} parent=1 // pred_check_branch
      %295 = sbr.rel (0) target = $region41
    $region40: #{tpu_custom_call.1} parent=1 // pred_region
      %296 = dma.done [#allocation5], 256
    $region41: #{tpu_custom_call.1} parent=1 // pred_fallthru
      _
    %297 = vsyncpa [#allocation4], 1
    %298 = vsyncpa [#allocation7], 1
    %299 = vsyncpa [#allocation5], 1

</llo_original>
